<compile_context>
chip_gen: v5e
topology: v5e:2x2
jax: 0.10.0
libtpu: 0.0.40
codegen_flags: <defaults>
</compile_context>

<pallas_src>
import jax
import jax.numpy as jnp
from jax.experimental import pallas as pl
from jax.experimental.pallas import tpu as pltpu


_TARGET_TILE_BYTES = 4 * 1024 * 1024   # ~4 MiB/buffer; double-buffered in+out ~16 MiB
_VMEM_LIMIT_BYTES = 40 << 20           # > v5e's 16 MiB scoped default, < v7x's 64 MiB VMEM


# ---------------------------------------------------------------------------
# Backward kernel: dx = -lambda * g   (elementwise, memory-bound)
# ---------------------------------------------------------------------------
def _neg_scale_kernel(nl_ref, g_ref, o_ref):
    # -lambda lives in SMEM (runtime scalar, no recompile when lambda anneals).
    neg_lambda = nl_ref[0, 0]
    # Multiply in f32 and cast the result back (accurate for bf16 grads).
    o_ref[...] = (g_ref[...].astype(jnp.float32) * neg_lambda).astype(o_ref.dtype)


def _choose_lanes(n):
    """Largest lane width (multiple of 128) dividing n, preferring >= 8 rows."""
    best = None
    for lanes in (2048, 1024, 512, 256, 128):
        if n % lanes == 0:
            if best is None:
                best = lanes
            if n // lanes >= 8:
                return lanes
    return best   # None iff n is not a multiple of 128


def _row_granule(itemsize):
    # Native sublane packing: f32 -> 8 rows, bf16 -> 16, int8/fp8 -> 32.
    return max(8, 32 // itemsize)


def _neg_scale_pallas_2d(g2d, neg_lambda):
    rows, lanes = g2d.shape
    itemsize = g2d.dtype.itemsize
    granule = _row_granule(itemsize)

    # Byte-budget tile sizing: biggest row count whose tile ~= _TARGET_TILE_BYTES.
    block_rows = max(granule,
                     (_TARGET_TILE_BYTES // (lanes * itemsize)) // granule * granule)
    if rows <= block_rows:
        if rows >= 2 * granule:
            # Split mid-sized grads into >=2 grid steps so the "parallel" grid
            # axis can shard across both TensorCores on v7x.
            half = (rows + 1) // 2
            block_rows = ((half + granule - 1) // granule) * granule
        else:
            block_rows = rows            # single full-extent block (always legal)

    grid = (pl.cdiv(rows, block_rows),)
    return pl.pallas_call(
        _neg_scale_kernel,
        out_shape=jax.ShapeDtypeStruct(g2d.shape, g2d.dtype),
        grid=grid,
        in_specs=[
            pl.BlockSpec((1, 1), lambda i: (0, 0),
                         memory_space=pltpu.MemorySpace.SMEM),
            pl.BlockSpec((block_rows, lanes), lambda i: (i, 0)),
        ],
        out_specs=pl.BlockSpec((block_rows, lanes), lambda i: (i, 0)),
        # Upstream grad is dead after the scale: write dx into its HBM buffer.
        input_output_aliases={1: 0},
        compiler_params=pltpu.CompilerParams(
            dimension_semantics=("parallel",),
            vmem_limit_bytes=_VMEM_LIMIT_BYTES),
    )(neg_lambda, g2d)


def _neg_scale(g, lambda_):
    """-lambda * g for arbitrary-shaped g via a lane-dense tiled Pallas kernel."""
    orig_shape = g.shape
    n = g.size
    if n == 0:
        return g
    neg_lambda = (-jnp.asarray(lambda_, jnp.float32)).reshape(1, 1)
    lanes = _choose_lanes(n)
    if lanes is None:
        # Element count not a multiple of 128: skip the kernel.  A plain XLA
        # multiply is already at the HBM roofline and avoids the pad + slice
        # round trips (~3x the HBM traffic) of a padded kernel launch.
        return (g.astype(jnp.float32) * neg_lambda[0, 0]).astype(g.dtype)
    g2d = g.reshape(n // lanes, lanes)
    out2d = _neg_scale_pallas_2d(g2d, neg_lambda)
    return out2d.reshape(orig_shape)


# ---------------------------------------------------------------------------
# GradientReversal via custom_vjp (matches the PyTorch autograd.Function)
# ---------------------------------------------------------------------------
@jax.custom_vjp
def _grl_prim(x, lambda_):
    return x                      # forward pass is the identity


def _grl_fwd(x, lambda_):
    return x, lambda_


def _grl_bwd(lambda_, g):
    # PyTorch returns (dx, None); lambda gets a zero cotangent here.
    return _neg_scale(g, lambda_), jnp.zeros_like(lambda_)


_grl_prim.defvjp(_grl_fwd, _grl_bwd)


def gradient_reversal(x, lambda_=1.0):
    # lambda is a traced runtime scalar (not a static closure constant), so
    # annealing it per training step never retraces/recompiles the kernel.
    return _grl_prim(x, jnp.asarray(lambda_, jnp.float32))


class GradientReversal:
    """Mirror of the PyTorch nn.Module (no parameters)."""

    def __init__(self, lambda_=1.0):
        self.lambda_ = float(lambda_)

    def __call__(self, x):
        return gradient_reversal(x, self.lambda_)


# ---------------------------------------------------------------------------
# Main
# ---------------------------------------------------------------------------
if __name__ == "__main__":
    key = jax.random.PRNGKey(0)

    # NCHW input, small shapes (batch=2, channels=4, spatial=16).
    x = jax.random.normal(key, (2, 4, 16, 16), dtype=jnp.float32)

    grl = GradientReversal(lambda_=1.0)

    # Forward: must be identity.
    y = jax.block_until_ready(grl(x))
    assert y.shape == x.shape and y.dtype == x.dtype
    assert jnp.allclose(y, x), "forward is not the identity"

    # Backward: grads of sum(grl(x)) should be -lambda everywhere.
    grads = jax.block_until_ready(jax.grad(lambda z: jnp.sum(grl(z)))(x))
    assert jnp.allclose(grads, -1.0 * jnp.ones_like(x)), "backward mismatch"

    # Non-default lambda + bf16 grads (f32 multiply, result cast back to bf16).
    grl2 = GradientReversal(lambda_=0.5)
    xb = x.astype(jnp.bfloat16)
    gb = jax.block_until_ready(
        jax.grad(lambda z: jnp.sum(grl2(z).astype(jnp.float32)))(xb))
    assert gb.dtype == jnp.bfloat16
    assert jnp.allclose(gb.astype(jnp.float32), -0.5 * jnp.ones_like(x)), \
        "bf16 backward mismatch"

    # Multi-step grid path (rows split into >=2 blocks -> both TCs on v7x).
    xm = jax.random.normal(key, (4, 64, 128), dtype=jnp.float32)
    gm = jax.block_until_ready(jax.grad(lambda z: jnp.sum(grl(z)))(xm))
    assert jnp.allclose(gm, -jnp.ones_like(xm)), "multi-block backward mismatch"

    # Element count not a multiple of 128 -> plain XLA fallback (no pad/slice).
    xo = jax.random.normal(key, (3, 5, 7), dtype=jnp.float32)
    go = jax.block_until_ready(jax.grad(lambda z: jnp.sum(grl(z)))(xo))
    assert jnp.allclose(go, -jnp.ones_like(xo)), "odd-shape backward mismatch"

    print("KERNEL_OK")
</pallas_src>

<mosaic_0001>
module attributes {stable_mosaic.version = 11 : i64} {
  func.func @_neg_scale_kernel(%arg0: i32, %arg1: memref<1x1xf32, #tpu.memory_space<smem>>, %arg2: memref<8x256xf32, #tpu.memory_space<vmem>>, %arg3: memref<8x256xf32, #tpu.memory_space<vmem>>) attributes {dimension_semantics = [#tpu.dimension_semantics<parallel>], iteration_bounds = array<i64: 1>, scalar_prefetch = 0 : i64, scratch_operands = 0 : i64, tpu.core_type = #tpu.core_type<tc>, window_params = [{transform_indices = @transform_0, window_bounds = array<i64: 1, 1>}, {transform_indices = @transform_1, window_bounds = array<i64: 8, 256>}, {transform_indices = @transform_2, window_bounds = array<i64: 8, 256>}]} {
    %c0 = arith.constant 0 : index
    %c0_0 = arith.constant 0 : index
    %0 = memref.load %arg1[%c0, %c0_0] : memref<1x1xf32, #tpu.memory_space<smem>>
    %c0_1 = arith.constant 0 : index
    %c0_2 = arith.constant 0 : index
    %1 = vector.load %arg2[%c0_1, %c0_2] : memref<8x256xf32, #tpu.memory_space<vmem>>, vector<8x256xf32>
    %2 = vector.broadcast %0 : f32 to vector<8x256xf32>
    %3 = arith.mulf %1, %2 : vector<8x256xf32>
    %c0_3 = arith.constant 0 : index
    %c0_4 = arith.constant 0 : index
    %4 = vector.load %arg3[%c0_3, %c0_4] : memref<8x256xf32, #tpu.memory_space<vmem>>, vector<8x256xf32>
    tpu.vector_store %arg3[%c0_3, %c0_4], %3 {strides = array<i32>} : memref<8x256xf32, #tpu.memory_space<vmem>>, vector<8x256xf32>,
    return
  }
  func.func @transform_0(%arg0: i32) -> (i32, i32) {
    %c0_i32 = arith.constant 0 : i32
    %c0_i32_0 = arith.constant 0 : i32
    %c0_i32_1 = arith.constant 0 : i32
    return %c0_i32, %c0_i32_0 : i32, i32
  }
  func.func @transform_1(%arg0: i32) -> (i32, i32) {
    %c0_i32 = arith.constant 0 : i32
    %c0_i32_0 = arith.constant 0 : i32
    return %arg0, %c0_i32 : i32, i32
  }
  func.func @transform_2(%arg0: i32) -> (i32, i32) {
    %c0_i32 = arith.constant 0 : i32
    %c0_i32_0 = arith.constant 0 : i32
    return %arg0, %c0_i32 : i32, i32
  }
}

</mosaic_0001>

<llo_original>
// kernel: tpu_custom_call.1
$region0: #{tpu_custom_call.1}
  #allocation0 [shape = 'u32[]', space=smem, size = 0x4, offset = 0x4, fixed_abs, tag = 'smem constant byte address 0x4 - core index']
  #allocation1 [shape = 'u32[72,128]{1,0:T(1,128)}', space=vmem, size = 0x9000, scoped, tag = 'internal scratch']
  #allocation2 [shape = 'f32[1,1]{1,0:T(1,128)S(6)}', space=smem, size = 0x200, scoped, tag = 'scoped memory for tpu_custom_call.1']
  %s0 = inlined_call_operand.<no memory space> [shape: f32[1,1], index: 0, kind: input, shape index: {}]
  %s1 = inlined_call_operand.hbm [shape: f32[8,256], index: 1, kind: input, shape index: {}, may-alias: {1,2}]
  %s2 = inlined_call_operand.hbm [shape: f32[8,256], index: 2, kind: output, shape index: {}, may-alias: {1,2}]
  %s3 = sld [smem:[#allocation0]]
  $region22: #{tpu_custom_call.1} parent=0
    _
  %s5 = ssub.s32 1, %s3
  %s6 = scalar_select 0, %s5, %s3
  %7 = sst [smem:[#allocation2]] %s0
  $region1: #{tpu_custom_call.1} parent=0
    #allocation3 [shape = 'u8[8192]{0}', space=vmem, size = 0x2000, scoped, tag = 'input window, operand 1, single buffered']
    #allocation4 [shape = 's32[1]{0}', space=sflag, size = 0x4, scoped, tag = 'scoped memory for tpu_custom_call.1']
    #allocation5 [shape = 's32[1]{0}', space=sflag, size = 0x4, scoped, tag = 'scoped memory for tpu_custom_call.1']
    #allocation6 [shape = 'u8[8192]{0}', space=vmem, size = 0x2000, scoped, tag = 'output window, operand 0, single buffered']
    %8 = vsyncpa [#allocation4], 0
    %9 = vsyncpa [#allocation5], 0
    // Predicated region
    $region2: #{tpu_custom_call.1} parent=1 // pred_check
      _
    $region3: #{tpu_custom_call.1} parent=1 // pred_check_branch
      %11 = sbr.rel (0) target = $region5
    $region4: #{tpu_custom_call.1} parent=1 // pred_region
      _
    $region5: #{tpu_custom_call.1} parent=1 // pred_fallthru
      _
    // Predicated region
    $region6: #{tpu_custom_call.1} parent=1 // pred_check
      _
    $region7: #{tpu_custom_call.1} parent=1 // pred_check_branch
      %13 = sbr.rel (0) target = $region9
    $region8: #{tpu_custom_call.1} parent=1 // pred_region
      %15 = vsyncadd [#allocation4], 0
      %s17 = sshll.u32 %s1, 4
      %s18 = int_to_ptr.hbm [resolvable:$true] %s17
      %s19 = sshll.u32 [#allocation3], 4
      %s20 = int_to_ptr.vmem [resolvable:$true] %s19
      %22 = dma.hbm_to_vmem [thread:$0]  %s18, 256, %s20, [#allocation4]
    $region9: #{tpu_custom_call.1} parent=1 // pred_fallthru
      _
    // Predicated region
    $region10: #{tpu_custom_call.1} parent=1 // pred_check
      _
    $region11: #{tpu_custom_call.1} parent=1 // pred_check_branch
      %24 = sbr.rel (0) target = $region13
    $region12: #{tpu_custom_call.1} parent=1 // pred_region
      %26 = dma.done [#allocation4], 256
    $region13: #{tpu_custom_call.1} parent=1 // pred_fallthru
      _
    %s27 = sld [smem:[#allocation2]]
    %v28 = vld [vmem:[#allocation3] sm:$0xff]
    %v29 = vld [vmem:[#allocation3 + $0x8] sm:$0xff]
    %v30 = vstv %s27
    %v31 = vmul.f32 %v28, %v30
    %v32 = vmul.f32 %v29, %v30
    %33 = vst [vmem:[#allocation6] sm:$0xff] %v31
    %34 = vst [vmem:[#allocation6 + $0x8] sm:$0xff] %v32
    // Predicated region
    $region14: #{tpu_custom_call.1} parent=1 // pred_check
      _
    $region15: #{tpu_custom_call.1} parent=1 // pred_check_branch
      %36 = sbr.rel (0) target = $region17
    $region16: #{tpu_custom_call.1} parent=1 // pred_region
      %38 = vsyncadd [#allocation5], 0
      %s40 = sshll.u32 [#allocation6], 4
      %s41 = int_to_ptr.vmem [resolvable:$true] %s40
      %s42 = sshll.u32 %s2, 4
      %s43 = int_to_ptr.hbm [resolvable:$true] %s42
      %45 = dma.vmem_to_hbm [thread:$0]  %s41, 256, %s43, [#allocation5]
    $region17: #{tpu_custom_call.1} parent=1 // pred_fallthru
      _
    // Predicated region
    $region18: #{tpu_custom_call.1} parent=1 // pred_check
      _
    $region19: #{tpu_custom_call.1} parent=1 // pred_check_branch
      %47 = sbr.rel (0) target = $region21
    $region20: #{tpu_custom_call.1} parent=1 // pred_region
      %49 = dma.done [#allocation5], 256
    $region21: #{tpu_custom_call.1} parent=1 // pred_fallthru
      _
    %50 = vsyncpa [#allocation4], 1
    %51 = vsyncpa [#allocation5], 1

</llo_original>
